<compile_context>
chip_gen: v5e
topology: v5e:2x2
jax: 0.10.0
libtpu: 0.0.40
codegen_flags: <defaults>
</compile_context>

<pallas_src>
import jax
import jax.numpy as jnp
from jax.experimental import pallas as pl
from jax.experimental.pallas import tpu as pltpu

D_IN = 40 * 40        # 1600
LANE = 128            # padded hidden width (120 -> 128, 84 -> 128)
N_OUT = 2
MAX_TILE_B = 1024     # upper bound on batch tile (f32 x tile = 6.55 MiB, 2x buffered)
MIN_GRID_STEPS = 8    # target >=8 grid steps (>=4 per TensorCore on v7x)
VMEM_LIMIT_BYTES = 48 << 20  # explicit budget: < v7x 64 MiB physical, < v5e/v6e 128 MiB


def fc_kernel(x_ref, w1_ref, b1_ref, w2_ref, b2_ref, w3_ref, b3_ref, o_ref):
    # One batch tile of the fused forward pass: 3 matmuls + 2 ReLUs + bias adds.
    # MXU operands in bf16, accumulation and bias adds in f32.
    x = x_ref[...].astype(jnp.bfloat16)
    h1 = jnp.dot(x, w1_ref[...], preferred_element_type=jnp.float32) + b1_ref[...]
    h1 = jnp.maximum(h1, 0.0).astype(jnp.bfloat16)
    h2 = jnp.dot(h1, w2_ref[...], preferred_element_type=jnp.float32) + b2_ref[...]
    h2 = jnp.maximum(h2, 0.0).astype(jnp.bfloat16)
    h3 = jnp.dot(h2, w3_ref[...], preferred_element_type=jnp.float32) + b3_ref[...]
    o_ref[...] = h3.astype(o_ref.dtype)


def _pad_params(params):
    """Zero-pad hidden dims (120, 84) to 128 lanes; weights cast to bf16.

    The padding is mathematically inert: zero weight columns + zero bias give
    zeros, ReLU(0)=0, and those lanes hit zero weight rows in the next layer.
    Biases stay f32 (added to the f32 accumulator).
    """
    w1, b1, w2, b2, w3, b3 = params
    w1p = jnp.pad(w1, ((0, 0), (0, LANE - w1.shape[1]))).astype(jnp.bfloat16)                  # (1600, 128)
    b1p = jnp.pad(b1, ((0, 0), (0, LANE - b1.shape[1])))                                       # (1, 128) f32
    w2p = jnp.pad(w2, ((0, LANE - w2.shape[0]), (0, LANE - w2.shape[1]))).astype(jnp.bfloat16) # (128, 128)
    b2p = jnp.pad(b2, ((0, 0), (0, LANE - b2.shape[1])))                                       # (1, 128) f32
    w3p = jnp.pad(w3, ((0, LANE - w3.shape[0]), (0, 0))).astype(jnp.bfloat16)                  # (128, 2)
    return w1p, b1p, w2p, b2p, w3p, b3


def _round_up(x, m):
    return ((x + m - 1) // m) * m


def fc_forward(x_nchw, params):
    """x_nchw: (B, 1, 40, 40) float32 -> (B, 2) float32."""
    B = x_nchw.shape[0]
    x_flat = x_nchw.reshape(B, D_IN)  # row-major == torch .view(-1, 40*40)

    w1, b1, w2, b2, w3, b3 = _pad_params(params)

    # Batch tile: multiple of 8 sublanes, sized so the grid has >= MIN_GRID_STEPS
    # steps (capped at MAX_TILE_B).  Ragged batches are handled by Pallas
    # partial blocks (last block reads past the end; OOB output rows are
    # masked on store), so no wrapper-side padding copy of x is made.
    tb = min(MAX_TILE_B, max(8, _round_up(pl.cdiv(B, MIN_GRID_STEPS), 8)))
    grid = (pl.cdiv(B, tb),)

    const = lambda i: (0, 0)  # weights/biases: DMA'd once, VMEM-resident across grid

    out = pl.pallas_call(
        fc_kernel,
        out_shape=jax.ShapeDtypeStruct((B, N_OUT), jnp.float32),
        grid=grid,
        in_specs=[
            pl.BlockSpec((tb, D_IN), lambda i: (i, 0)),   # x: pipelined per batch tile (f32)
            pl.BlockSpec((D_IN, LANE), const),            # w1 (bf16)
            pl.BlockSpec((1, LANE), const),               # b1 (f32)
            pl.BlockSpec((LANE, LANE), const),            # w2 (bf16)
            pl.BlockSpec((1, LANE), const),               # b2 (f32)
            pl.BlockSpec((LANE, N_OUT), const),           # w3 (bf16)
            pl.BlockSpec((1, N_OUT), const),              # b3 (f32)
        ],
        out_specs=pl.BlockSpec((tb, N_OUT), lambda i: (i, 0)),
        compiler_params=pltpu.CompilerParams(
            dimension_semantics=("parallel",),   # shard batch tiles across v7x's 2 TCs
            vmem_limit_bytes=VMEM_LIMIT_BYTES,
        ),
    )(x_flat, w1, b1, w2, b2, w3, b3)
    return out


def init_params(key):
    """Deterministic init mimicking PyTorch nn.Linear defaults
    (uniform(-1/sqrt(fan_in), 1/sqrt(fan_in)) for weight and bias).
    Weights stored as (in_features, out_features); biases as (1, out)."""
    dims = [(D_IN, 120), (120, 84), (84, N_OUT)]
    params = []
    for fan_in, fan_out in dims:
        key, kw, kb = jax.random.split(key, 3)
        bound = 1.0 / (fan_in ** 0.5)
        w = jax.random.uniform(kw, (fan_in, fan_out), jnp.float32, -bound, bound)
        b = jax.random.uniform(kb, (1, fan_out), jnp.float32, -bound, bound)
        params += [w, b]
    return tuple(params)


def _reference(x_nchw, params):
    # Pure-JAX f32 reference (kernel uses bf16 MXU operands -> loose tolerance).
    w1, b1, w2, b2, w3, b3 = params
    xf = x_nchw.reshape(x_nchw.shape[0], D_IN)
    h = jnp.maximum(xf @ w1 + b1, 0.0)
    h = jnp.maximum(h @ w2 + b2, 0.0)
    return h @ w3 + b3


if __name__ == "__main__":
    key = jax.random.PRNGKey(0)
    k_x1, k_x2, k_p = jax.random.split(key, 3)
    params = init_params(k_p)

    # Small batch consistent with forward(): view(-1, 40*40) -> (B, 1, 40, 40).
    x_small = jax.random.uniform(k_x1, (2, 1, 40, 40), jnp.float32)
    out_small = fc_forward(x_small, params)
    jax.block_until_ready(out_small)
    assert out_small.shape == (2, N_OUT)
    assert jnp.allclose(out_small, _reference(x_small, params), atol=2e-2, rtol=2e-2)

    # Batch not a multiple of the tile: exercises the partial-block path.
    x_odd = jax.random.uniform(k_x2, (10, 1, 40, 40), jnp.float32)
    out_odd = fc_forward(x_odd, params)
    jax.block_until_ready(out_odd)
    assert out_odd.shape == (10, N_OUT)
    assert jnp.allclose(out_odd, _reference(x_odd, params), atol=2e-2, rtol=2e-2)

    print("KERNEL_OK")
</pallas_src>

<mosaic_0001>
module attributes {stable_mosaic.version = 11 : i64} {
  func.func @fc_kernel(%arg0: i32, %arg1: memref<8x1600xf32, #tpu.memory_space<vmem>>, %arg2: memref<1600x128xbf16, #tpu.memory_space<vmem>>, %arg3: memref<1x128xf32, #tpu.memory_space<vmem>>, %arg4: memref<128x128xbf16, #tpu.memory_space<vmem>>, %arg5: memref<1x128xf32, #tpu.memory_space<vmem>>, %arg6: memref<128x2xbf16, #tpu.memory_space<vmem>>, %arg7: memref<1x2xf32, #tpu.memory_space<vmem>>, %arg8: memref<8x2xf32, #tpu.memory_space<vmem>>) attributes {dimension_semantics = [#tpu.dimension_semantics<parallel>], iteration_bounds = array<i64: 1>, scalar_prefetch = 0 : i64, scratch_operands = 0 : i64, tpu.core_type = #tpu.core_type<tc>, window_params = [{transform_indices = @transform_0, window_bounds = array<i64: 8, 1600>}, {pipeline_mode = #tpu.pipeline_mode<synchronous>, transform_indices = @transform_1, window_bounds = array<i64: 1600, 128>}, {pipeline_mode = #tpu.pipeline_mode<synchronous>, transform_indices = @transform_2, window_bounds = array<i64: 1, 128>}, {pipeline_mode = #tpu.pipeline_mode<synchronous>, transform_indices = @transform_3, window_bounds = array<i64: 128, 128>}, {pipeline_mode = #tpu.pipeline_mode<synchronous>, transform_indices = @transform_4, window_bounds = array<i64: 1, 128>}, {pipeline_mode = #tpu.pipeline_mode<synchronous>, transform_indices = @transform_5, window_bounds = array<i64: 128, 2>}, {pipeline_mode = #tpu.pipeline_mode<synchronous>, transform_indices = @transform_6, window_bounds = array<i64: 1, 2>}, {transform_indices = @transform_7, window_bounds = array<i64: 8, 2>}]} {
    %c0 = arith.constant 0 : index
    %c0_0 = arith.constant 0 : index
    %0 = vector.load %arg1[%c0, %c0_0] : memref<8x1600xf32, #tpu.memory_space<vmem>>, vector<8x1600xf32>
    %1 = arith.truncf %0 : vector<8x1600xf32> to vector<8x1600xbf16>
    %c0_1 = arith.constant 0 : index
    %c0_2 = arith.constant 0 : index
    %2 = vector.load %arg2[%c0_1, %c0_2] : memref<1600x128xbf16, #tpu.memory_space<vmem>>, vector<1600x128xbf16>
    %cst = arith.constant dense<0.000000e+00> : vector<8x128xf32>
    %3 = tpu.matmul %1, %2, %cst {dimension_numbers = #tpu.dot_dimension_numbers<[1], [0], [0], [1], [0, 0, 1, 1], [], []>} : vector<8x1600xbf16>, vector<1600x128xbf16>, vector<8x128xf32> -> vector<8x128xf32>
    %c0_3 = arith.constant 0 : index
    %c0_4 = arith.constant 0 : index
    %4 = vector.load %arg3[%c0_3, %c0_4] : memref<1x128xf32, #tpu.memory_space<vmem>>, vector<1x128xf32>
    %5 = vector.broadcast %4 : vector<1x128xf32> to vector<8x128xf32>
    %6 = arith.addf %3, %5 : vector<8x128xf32>
    %cst_5 = arith.constant 0.000000e+00 : f32
    %7 = vector.broadcast %cst_5 : f32 to vector<8x128xf32>
    %8 = arith.maximumf %6, %7 : vector<8x128xf32>
    %9 = arith.truncf %8 : vector<8x128xf32> to vector<8x128xbf16>
    %c0_6 = arith.constant 0 : index
    %c0_7 = arith.constant 0 : index
    %10 = vector.load %arg4[%c0_6, %c0_7] : memref<128x128xbf16, #tpu.memory_space<vmem>>, vector<128x128xbf16>
    %cst_8 = arith.constant dense<0.000000e+00> : vector<8x128xf32>
    %11 = tpu.matmul %9, %10, %cst_8 {dimension_numbers = #tpu.dot_dimension_numbers<[1], [0], [0], [1], [0, 0, 1, 1], [], []>} : vector<8x128xbf16>, vector<128x128xbf16>, vector<8x128xf32> -> vector<8x128xf32>
    %c0_9 = arith.constant 0 : index
    %c0_10 = arith.constant 0 : index
    %12 = vector.load %arg5[%c0_9, %c0_10] : memref<1x128xf32, #tpu.memory_space<vmem>>, vector<1x128xf32>
    %13 = vector.broadcast %12 : vector<1x128xf32> to vector<8x128xf32>
    %14 = arith.addf %11, %13 : vector<8x128xf32>
    %cst_11 = arith.constant 0.000000e+00 : f32
    %15 = vector.broadcast %cst_11 : f32 to vector<8x128xf32>
    %16 = arith.maximumf %14, %15 : vector<8x128xf32>
    %17 = arith.truncf %16 : vector<8x128xf32> to vector<8x128xbf16>
    %c0_12 = arith.constant 0 : index
    %c0_13 = arith.constant 0 : index
    %18 = vector.load %arg6[%c0_12, %c0_13] : memref<128x2xbf16, #tpu.memory_space<vmem>>, vector<128x2xbf16>
    %cst_14 = arith.constant dense<0.000000e+00> : vector<8x2xf32>
    %19 = tpu.matmul %17, %18, %cst_14 {dimension_numbers = #tpu.dot_dimension_numbers<[1], [0], [0], [1], [0, 0, 1, 1], [], []>} : vector<8x128xbf16>, vector<128x2xbf16>, vector<8x2xf32> -> vector<8x2xf32>
    %c0_15 = arith.constant 0 : index
    %c0_16 = arith.constant 0 : index
    %20 = vector.load %arg7[%c0_15, %c0_16] : memref<1x2xf32, #tpu.memory_space<vmem>>, vector<1x2xf32>
    %21 = vector.broadcast %20 : vector<1x2xf32> to vector<8x2xf32>
    %22 = arith.addf %19, %21 : vector<8x2xf32>
    %c0_17 = arith.constant 0 : index
    %c0_18 = arith.constant 0 : index
    %23 = vector.load %arg8[%c0_17, %c0_18] : memref<8x2xf32, #tpu.memory_space<vmem>>, vector<8x2xf32>
    tpu.vector_store %arg8[%c0_17, %c0_18], %22 {strides = array<i32>} : memref<8x2xf32, #tpu.memory_space<vmem>>, vector<8x2xf32>,
    return
  }
  func.func @transform_0(%arg0: i32) -> (i32, i32) {
    %c0_i32 = arith.constant 0 : i32
    %c0_i32_0 = arith.constant 0 : i32
    return %arg0, %c0_i32 : i32, i32
  }
  func.func @transform_1(%arg0: i32) -> (i32, i32) {
    %c0_i32 = arith.constant 0 : i32
    %c0_i32_0 = arith.constant 0 : i32
    %c0_i32_1 = arith.constant 0 : i32
    return %c0_i32, %c0_i32_0 : i32, i32
  }
  func.func @transform_2(%arg0: i32) -> (i32, i32) {
    %c0_i32 = arith.constant 0 : i32
    %c0_i32_0 = arith.constant 0 : i32
    %c0_i32_1 = arith.constant 0 : i32
    return %c0_i32, %c0_i32_0 : i32, i32
  }
  func.func @transform_3(%arg0: i32) -> (i32, i32) {
    %c0_i32 = arith.constant 0 : i32
    %c0_i32_0 = arith.constant 0 : i32
    %c0_i32_1 = arith.constant 0 : i32
    return %c0_i32, %c0_i32_0 : i32, i32
  }
  func.func @transform_4(%arg0: i32) -> (i32, i32) {
    %c0_i32 = arith.constant 0 : i32
    %c0_i32_0 = arith.constant 0 : i32
    %c0_i32_1 = arith.constant 0 : i32
    return %c0_i32, %c0_i32_0 : i32, i32
  }
  func.func @transform_5(%arg0: i32) -> (i32, i32) {
    %c0_i32 = arith.constant 0 : i32
    %c0_i32_0 = arith.constant 0 : i32
    %c0_i32_1 = arith.constant 0 : i32
    return %c0_i32, %c0_i32_0 : i32, i32
  }
  func.func @transform_6(%arg0: i32) -> (i32, i32) {
    %c0_i32 = arith.constant 0 : i32
    %c0_i32_0 = arith.constant 0 : i32
    %c0_i32_1 = arith.constant 0 : i32
    return %c0_i32, %c0_i32_0 : i32, i32
  }
  func.func @transform_7(%arg0: i32) -> (i32, i32) {
    %c0_i32 = arith.constant 0 : i32
    %c0_i32_0 = arith.constant 0 : i32
    return %arg0, %c0_i32 : i32, i32
  }
}

</mosaic_0001>

<llo_original>
// kernel: tpu_custom_call.1
$region0: #{tpu_custom_call.1}
  #allocation0 [shape = 'u32[]', space=smem, size = 0x4, offset = 0x4, fixed_abs, tag = 'smem constant byte address 0x4 - core index']
  #allocation1 [shape = 'u32[72,128]{1,0:T(1,128)}', space=vmem, size = 0x9000, scoped, tag = 'internal scratch']
  %s0 = inlined_call_operand.hbm [shape: f32[2,1600], index: 0, kind: input, shape index: {}]
  %s1 = inlined_call_operand.hbm [shape: bf16[1600,128], index: 1, kind: input, shape index: {}]
  %s2 = inlined_call_operand.vmem [shape: f32[1,128], index: 2, kind: input, shape index: {}]
  %s3 = inlined_call_operand.vmem [shape: bf16[128,128], index: 3, kind: input, shape index: {}]
  %s4 = inlined_call_operand.vmem [shape: f32[1,128], index: 4, kind: input, shape index: {}]
  %s5 = inlined_call_operand.vmem [shape: bf16[128,2], index: 5, kind: input, shape index: {}]
  %s6 = inlined_call_operand.vmem [shape: f32[1,2], index: 6, kind: input, shape index: {}]
  %s7 = inlined_call_operand.hbm [shape: f32[2,2], index: 7, kind: output, shape index: {}]
  %s8 = sld [smem:[#allocation0]]
  $region46: #{tpu_custom_call.1} parent=0
    _
  %s10 = ssub.s32 1, %s8
  %s11 = scalar_select 0, %s10, %s8
  $region1: #{tpu_custom_call.1} parent=0
    #allocation2 [shape = 'u8[53248]{0}', space=vmem, size = 0xd000, scoped, tag = 'input window, operand 0, single buffered']
    #allocation3 [shape = 's32[1]{0}', space=sflag, size = 0x4, scoped, tag = 'scoped memory for tpu_custom_call.1']
    #allocation4 [shape = 's32[1]{0}', space=sflag, size = 0x4, scoped, tag = 'scoped memory for tpu_custom_call.1']
    #allocation5 [shape = 'u8[409600]{0}', space=vmem, size = 0x64000, scoped, tag = 'input window, operand 1, single buffered']
    #allocation6 [shape = 's32[1]{0}', space=sflag, size = 0x4, scoped, tag = 'scoped memory for tpu_custom_call.1']
    #allocation7 [shape = 'u8[4096]{0}', space=vmem, size = 0x1000, scoped, tag = 'output window, operand 0, single buffered']
    %12 = vsyncpa [#allocation3], 0
    %13 = vsyncpa [#allocation6], 0
    %14 = vsyncpa [#allocation4], 0
    // Predicated region
    $region2: #{tpu_custom_call.1} parent=1 // pred_check
      _
    $region3: #{tpu_custom_call.1} parent=1 // pred_check_branch
      %16 = sbr.rel (0) target = $region5
    $region4: #{tpu_custom_call.1} parent=1 // pred_region
      %18 = vsyncadd [#allocation3], 1248
      %s19 = sshll.u32 %s0, 4
      %s20 = int_to_ptr.hbm [resolvable:$true] %s19
      %s21 = sshll.u32 [#allocation2], 4
      %s22 = int_to_ptr.vmem [resolvable:$true] %s21
      %27 = dma.hbm_to_vmem [thread:$0]  %s20, 416, %s22, [#allocation3], 416, 416, 26
    $region5: #{tpu_custom_call.1} parent=1 // pred_fallthru
      _
    // Predicated region
    $region6: #{tpu_custom_call.1} parent=1 // pred_check
      _
    $region7: #{tpu_custom_call.1} parent=1 // pred_check_branch
      %29 = sbr.rel (0) target = $region9
    $region8: #{tpu_custom_call.1} parent=1 // pred_region
      %31 = vsyncadd [#allocation6], 0
      %s32 = sshll.u32 %s1, 4
      %s33 = int_to_ptr.hbm [resolvable:$true] %s32
      %s34 = sshll.u32 [#allocation5], 4
      %s35 = int_to_ptr.vmem [resolvable:$true] %s34
      %40 = dma.hbm_to_vmem [thread:$0]  %s33, 12800, %s35, [#allocation6], 64, 64, 4
    $region9: #{tpu_custom_call.1} parent=1 // pred_fallthru
      _
    // Predicated region
    $region10: #{tpu_custom_call.1} parent=1 // pred_check
      _
    $region11: #{tpu_custom_call.1} parent=1 // pred_check_branch
      %42 = sbr.rel (0) target = $region13
    $region12: #{tpu_custom_call.1} parent=1 // pred_region
      _
    $region13: #{tpu_custom_call.1} parent=1 // pred_fallthru
      _
    // Predicated region
    $region14: #{tpu_custom_call.1} parent=1 // pred_check
      _
    $region15: #{tpu_custom_call.1} parent=1 // pred_check_branch
      %44 = sbr.rel (0) target = $region17
    $region16: #{tpu_custom_call.1} parent=1 // pred_region
      _
    $region17: #{tpu_custom_call.1} parent=1 // pred_fallthru
      _
    // Predicated region
    $region18: #{tpu_custom_call.1} parent=1 // pred_check
      _
    $region19: #{tpu_custom_call.1} parent=1 // pred_check_branch
      %46 = sbr.rel (0) target = $region21
    $region20: #{tpu_custom_call.1} parent=1 // pred_region
      _
    $region21: #{tpu_custom_call.1} parent=1 // pred_fallthru
      _
    // Predicated region
    $region22: #{tpu_custom_call.1} parent=1 // pred_check
      _
    $region23: #{tpu_custom_call.1} parent=1 // pred_check_branch
      %48 = sbr.rel (0) target = $region25
    $region24: #{tpu_custom_call.1} parent=1 // pred_region
      _
    $region25: #{tpu_custom_call.1} parent=1 // pred_fallthru
      _
    // Predicated region
    $region26: #{tpu_custom_call.1} parent=1 // pred_check
      _
    $region27: #{tpu_custom_call.1} parent=1 // pred_check_branch
      %50 = sbr.rel (0) target = $region29
    $region28: #{tpu_custom_call.1} parent=1 // pred_region
      _
    $region29: #{tpu_custom_call.1} parent=1 // pred_fallthru
      _
    // Predicated region
    $region30: #{tpu_custom_call.1} parent=1 // pred_check
      _
    $region31: #{tpu_custom_call.1} parent=1 // pred_check_branch
      %52 = sbr.rel (0) target = $region33
    $region32: #{tpu_custom_call.1} parent=1 // pred_region
      %54 = dma.done [#allocation3], 1664
    $region33: #{tpu_custom_call.1} parent=1 // pred_fallthru
      _
    // Predicated region
    $region34: #{tpu_custom_call.1} parent=1 // pred_check
      _
    $region35: #{tpu_custom_call.1} parent=1 // pred_check_branch
      %56 = sbr.rel (0) target = $region37
    $region36: #{tpu_custom_call.1} parent=1 // pred_region
      %58 = dma.done [#allocation6], 12800
    $region37: #{tpu_custom_call.1} parent=1 // pred_fallthru
      _
    %v60 = vld [vmem:[#allocation2] sm:$0xff]
    %v61 = vld [vmem:[#allocation2 + $0x8] sm:$0xff]
    %v62 = vld [vmem:[#allocation2 + $0x10] sm:$0xff]
    %v63 = vld [vmem:[#allocation2 + $0x18] sm:$0x3]
    %v64 = vld [vmem:[#allocation2 + $0x1a] sm:$0xff]
    %v65 = vld [vmem:[#allocation2 + $0x22] sm:$0xff]
    %v66 = vld [vmem:[#allocation2 + $0x2a] sm:$0xff]
    %v67 = vld [vmem:[#allocation2 + $0x32] sm:$0x3]
    %v68 = vld [vmem:[#allocation2 + $0x34] sm:$0xff]
    %v69 = vld [vmem:[#allocation2 + $0x3c] sm:$0xff]
    %v70 = vld [vmem:[#allocation2 + $0x44] sm:$0xff]
    %v71 = vld [vmem:[#allocation2 + $0x4c] sm:$0x3]
    %v72 = vld [vmem:[#allocation2 + $0x4e] sm:$0xff]
    %v73 = vld [vmem:[#allocation2 + $0x56] sm:$0xff]
    %v74 = vld [vmem:[#allocation2 + $0x5e] sm:$0xff]
    %v75 = vld [vmem:[#allocation2 + $0x66] sm:$0x3]
    %92 = vst [vmem:[#allocation1] ss:$4 sm:$0xff] %v60
    %s93 = scalar_lea.vmem [#allocation1], 1
    %94 = vst [vmem:[%s93] ss:$4 sm:$0xff] %v64
    %s95 = scalar_lea.vmem [#allocation1], 2
    %96 = vst [vmem:[%s95] ss:$4 sm:$0xff] %v68
    %s97 = scalar_lea.vmem [#allocation1], 3
    %98 = vst [vmem:[%s97] ss:$4 sm:$0xff] %v72
    %s99 = scalar_lea.vmem [#allocation1], 32
    %100 = vst [vmem:[%s99] ss:$4 sm:$0xff] %v61
    %s101 = scalar_lea.vmem [#allocation1], 33
    %102 = vst [vmem:[%s101] ss:$4 sm:$0xff] %v65
    %s103 = scalar_lea.vmem [#allocation1], 34
    %104 = vst [vmem:[%s103] ss:$4 sm:$0xff] %v69
    %s105 = scalar_lea.vmem [#allocation1], 35
    %106 = vst [vmem:[%s105] ss:$4 sm:$0xff] %v73
    %v107 = vld.sshfl [vmem:[#allocation1] sm:$0xff pattern:$0x73625140]
    %v108 = vld.sshfl [vmem:[#allocation1 + $0x8] sm:$0xff pattern:$0x73625140]
    %v109 = vld.sshfl [vmem:[#allocation1 + $0x10] sm:$0xff pattern:$0x73625140]
    %v110 = vld.sshfl [vmem:[#allocation1 + $0x18] sm:$0xff pattern:$0x73625140]
    %v111 = vld.sshfl [vmem:[#allocation1 + $0x20] sm:$0xff pattern:$0x73625140]
    %v112 = vld.sshfl [vmem:[#allocation1 + $0x28] sm:$0xff pattern:$0x73625140]
    %v113 = vld.sshfl [vmem:[#allocation1 + $0x30] sm:$0xff pattern:$0x73625140]
    %v114 = vld.sshfl [vmem:[#allocation1 + $0x38] sm:$0xff pattern:$0x73625140]
    %115 = vst [vmem:[#allocation1] ss:$4 sm:$0xff] %v62
    %116 = vst [vmem:[%s93] ss:$4 sm:$0xff] %v66
    %117 = vst [vmem:[%s95] ss:$4 sm:$0xff] %v70
    %118 = vst [vmem:[%s97] ss:$4 sm:$0xff] %v74
    %119 = vst [vmem:[%s99] ss:$4 sm:$0xff] %v63
    %120 = vst [vmem:[%s101] ss:$4 sm:$0xff] %v67
    %121 = vst [vmem:[%s103] ss:$4 sm:$0xff] %v71
    %122 = vst [vmem:[%s105] ss:$4 sm:$0xff] %v75
    %v123 = vld.sshfl [vmem:[#allocation1] sm:$0xff pattern:$0x73625140]
    %v124 = vld.sshfl [vmem:[#allocation1 + $0x8] sm:$0xff pattern:$0x73625140]
    %v125 = vld.sshfl [vmem:[#allocation1 + $0x10] sm:$0xff pattern:$0x73625140]
    %v126 = vld.sshfl [vmem:[#allocation1 + $0x18] sm:$0xff pattern:$0x73625140]
    %v127 = vld.sshfl [vmem:[#allocation1 + $0x20] sm:$0xff pattern:$0x73625140]
    %v141 = vpack.c.bf16 %v107, %v107
    %v142 = vpack.c.bf16 %v108, %v108
    %v143 = vpack.c.bf16 %v109, %v109
    %v144 = vpack.c.bf16 %v110, %v110
    %v145 = vpack.c.bf16 %v111, %v111
    %v146 = vpack.c.bf16 %v112, %v112
    %v147 = vpack.c.bf16 %v113, %v113
    %v148 = vpack.c.bf16 %v114, %v114
    %v149 = vpack.c.bf16 %v123, %v123
    %v150 = vpack.c.bf16 %v124, %v124
    %v151 = vpack.c.bf16 %v125, %v125
    %v152 = vpack.c.bf16 %v126, %v126
    %v153 = vpack.c.bf16 %v127, %v127
    %v154 = vld [vmem:[#allocation5] sm:$0xf]
    %v155 = vld [vmem:[#allocation5 + $0x4] sm:$0xf]
    %v156 = vld [vmem:[#allocation5 + $0x8] sm:$0xf]
    %v157 = vld [vmem:[#allocation5 + $0xc] sm:$0xf]
    %v158 = vld [vmem:[#allocation5 + $0x10] sm:$0xf]
    %v159 = vld [vmem:[#allocation5 + $0x14] sm:$0xf]
    %v160 = vld [vmem:[#allocation5 + $0x18] sm:$0xf]
    %v161 = vld [vmem:[#allocation5 + $0x1c] sm:$0xf]
    %v162 = vld [vmem:[#allocation5 + $0x20] sm:$0xf]
    %v163 = vld [vmem:[#allocation5 + $0x24] sm:$0xf]
    %v164 = vld [vmem:[#allocation5 + $0x28] sm:$0xf]
    %v165 = vld [vmem:[#allocation5 + $0x2c] sm:$0xf]
    %v166 = vld [vmem:[#allocation5 + $0x30] sm:$0xf]
    %v167 = vld [vmem:[#allocation5 + $0x34] sm:$0xf]
    %v168 = vld [vmem:[#allocation5 + $0x38] sm:$0xf]
    %v169 = vld [vmem:[#allocation5 + $0x3c] sm:$0xf]
    %v170 = vld [vmem:[#allocation5 + $0x40] sm:$0xf]
    %v171 = vld [vmem:[#allocation5 + $0x44] sm:$0xf]
    %v172 = vld [vmem:[#allocation5 + $0x48] sm:$0xf]
    %v173 = vld [vmem:[#allocation5 + $0x4c] sm:$0xf]
    %v174 = vld [vmem:[#allocation5 + $0x50] sm:$0xf]
    %v175 = vld [vmem:[#allocation5 + $0x54] sm:$0xf]
    %v176 = vld [vmem:[#allocation5 + $0x58] sm:$0xf]
    %v177 = vld [vmem:[#allocation5 + $0x5c] sm:$0xf]
    %v178 = vld [vmem:[#allocation5 + $0x60] sm:$0xf]
    %v179 = vld [vmem:[#allocation5 + $0x64] sm:$0xf]
    %v180 = vld [vmem:[#allocation5 + $0x68] sm:$0xf]
    %v181 = vld [vmem:[#allocation5 + $0x6c] sm:$0xf]
    %v182 = vld [vmem:[#allocation5 + $0x70] sm:$0xf]
    %v183 = vld [vmem:[#allocation5 + $0x74] sm:$0xf]
    %v184 = vld [vmem:[#allocation5 + $0x78] sm:$0xf]
    %v185 = vld [vmem:[#allocation5 + $0x7c] sm:$0xf]
    %v186 = vld [vmem:[#allocation5 + $0x80] sm:$0xf]
    %v187 = vld [vmem:[#allocation5 + $0x84] sm:$0xf]
    %v188 = vld [vmem:[#allocation5 + $0x88] sm:$0xf]
    %v189 = vld [vmem:[#allocation5 + $0x8c] sm:$0xf]
    %v190 = vld [vmem:[#allocation5 + $0x90] sm:$0xf]
    %v191 = vld [vmem:[#allocation5 + $0x94] sm:$0xf]
    %v192 = vld [vmem:[#allocation5 + $0x98] sm:$0xf]
    %v193 = vld [vmem:[#allocation5 + $0x9c] sm:$0xf]
    %v194 = vld [vmem:[#allocation5 + $0xa0] sm:$0xf]
    %v195 = vld [vmem:[#allocation5 + $0xa4] sm:$0xf]
    %v196 = vld [vmem:[#allocation5 + $0xa8] sm:$0xf]
    %v197 = vld [vmem:[#allocation5 + $0xac] sm:$0xf]
    %v198 = vld [vmem:[#allocation5 + $0xb0] sm:$0xf]
    %v199 = vld [vmem:[#allocation5 + $0xb4] sm:$0xf]
    %v200 = vld [vmem:[#allocation5 + $0xb8] sm:$0xf]
    %v201 = vld [vmem:[#allocation5 + $0xbc] sm:$0xf]
    %v202 = vld [vmem:[#allocation5 + $0xc0] sm:$0xf]
    %v203 = vld [vmem:[#allocation5 + $0xc4] sm:$0xf]
    %v204 = vld [vmem:[#allocation5 + $0xc8] sm:$0xf]
    %v205 = vld [vmem:[#allocation5 + $0xcc] sm:$0xf]
    %v206 = vld [vmem:[#allocation5 + $0xd0] sm:$0xf]
    %v207 = vld [vmem:[#allocation5 + $0xd4] sm:$0xf]
    %v208 = vld [vmem:[#allocation5 + $0xd8] sm:$0xf]
    %v209 = vld [vmem:[#allocation5 + $0xdc] sm:$0xf]
    %v210 = vld [vmem:[#allocation5 + $0xe0] sm:$0xf]
    %v211 = vld [vmem:[#allocation5 + $0xe4] sm:$0xf]
    %v212 = vld [vmem:[#allocation5 + $0xe8] sm:$0xf]
    %v213 = vld [vmem:[#allocation5 + $0xec] sm:$0xf]
    %v214 = vld [vmem:[#allocation5 + $0xf0] sm:$0xf]
    %v215 = vld [vmem:[#allocation5 + $0xf4] sm:$0xf]
    %v216 = vld [vmem:[#allocation5 + $0xf8] sm:$0xf]
    %v217 = vld [vmem:[#allocation5 + $0xfc] sm:$0xf]
    %v218 = vld [vmem:[#allocation5 + $0x100] sm:$0xf]
    %v219 = vld [vmem:[#allocation5 + $0x104] sm:$0xf]
    %v220 = vld [vmem:[#allocation5 + $0x108] sm:$0xf]
    %v221 = vld [vmem:[#allocation5 + $0x10c] sm:$0xf]
    %v222 = vld [vmem:[#allocation5 + $0x110] sm:$0xf]
    %v223 = vld [vmem:[#allocation5 + $0x114] sm:$0xf]
    %v224 = vld [vmem:[#allocation5 + $0x118] sm:$0xf]
    %v225 = vld [vmem:[#allocation5 + $0x11c] sm:$0xf]
    %v226 = vld [vmem:[#allocation5 + $0x120] sm:$0xf]
    %v227 = vld [vmem:[#allocation5 + $0x124] sm:$0xf]
    %v228 = vld [vmem:[#allocation5 + $0x128] sm:$0xf]
    %v229 = vld [vmem:[#allocation5 + $0x12c] sm:$0xf]
    %v230 = vld [vmem:[#allocation5 + $0x130] sm:$0xf]
    %v231 = vld [vmem:[#allocation5 + $0x134] sm:$0xf]
    %v232 = vld [vmem:[#allocation5 + $0x138] sm:$0xf]
    %v233 = vld [vmem:[#allocation5 + $0x13c] sm:$0xf]
    %v234 = vld [vmem:[#allocation5 + $0x140] sm:$0xf]
    %v235 = vld [vmem:[#allocation5 + $0x144] sm:$0xf]
    %v236 = vld [vmem:[#allocation5 + $0x148] sm:$0xf]
    %v237 = vld [vmem:[#allocation5 + $0x14c] sm:$0xf]
    %v238 = vld [vmem:[#allocation5 + $0x150] sm:$0xf]
    %v239 = vld [vmem:[#allocation5 + $0x154] sm:$0xf]
    %v240 = vld [vmem:[#allocation5 + $0x158] sm:$0xf]
    %v241 = vld [vmem:[#allocation5 + $0x15c] sm:$0xf]
    %v242 = vld [vmem:[#allocation5 + $0x160] sm:$0xf]
    %v243 = vld [vmem:[#allocation5 + $0x164] sm:$0xf]
    %v244 = vld [vmem:[#allocation5 + $0x168] sm:$0xf]
    %v245 = vld [vmem:[#allocation5 + $0x16c] sm:$0xf]
    %v246 = vld [vmem:[#allocation5 + $0x170] sm:$0xf]
    %v247 = vld [vmem:[#allocation5 + $0x174] sm:$0xf]
    %v248 = vld [vmem:[#allocation5 + $0x178] sm:$0xf]
    %v249 = vld [vmem:[#allocation5 + $0x17c] sm:$0xf]
    %v250 = vld [vmem:[#allocation5 + $0x180] sm:$0xf]
    %v251 = vld [vmem:[#allocation5 + $0x184] sm:$0xf]
    %v252 = vld [vmem:[#allocation5 + $0x188] sm:$0xf]
    %v253 = vld [vmem:[#allocation5 + $0x18c] sm:$0xf]
    %v254 = vld [vmem:[#allocation5 + $0x190] sm:$0xf]
    %v255 = vld [vmem:[#allocation5 + $0x194] sm:$0xf]
    %v256 = vld [vmem:[#allocation5 + $0x198] sm:$0xf]
    %v257 = vld [vmem:[#allocation5 + $0x19c] sm:$0xf]
    %v258 = vld [vmem:[#allocation5 + $0x1a0] sm:$0xf]
    %v259 = vld [vmem:[#allocation5 + $0x1a4] sm:$0xf]
    %v260 = vld [vmem:[#allocation5 + $0x1a8] sm:$0xf]
    %v261 = vld [vmem:[#allocation5 + $0x1ac] sm:$0xf]
    %v262 = vld [vmem:[#allocation5 + $0x1b0] sm:$0xf]
    %v263 = vld [vmem:[#allocation5 + $0x1b4] sm:$0xf]
    %v264 = vld [vmem:[#allocation5 + $0x1b8] sm:$0xf]
    %v265 = vld [vmem:[#allocation5 + $0x1bc] sm:$0xf]
    %v266 = vld [vmem:[#allocation5 + $0x1c0] sm:$0xf]
    %v267 = vld [vmem:[#allocation5 + $0x1c4] sm:$0xf]
    %v268 = vld [vmem:[#allocation5 + $0x1c8] sm:$0xf]
    %v269 = vld [vmem:[#allocation5 + $0x1cc] sm:$0xf]
    %v270 = vld [vmem:[#allocation5 + $0x1d0] sm:$0xf]
    %v271 = vld [vmem:[#allocation5 + $0x1d4] sm:$0xf]
    %v272 = vld [vmem:[#allocation5 + $0x1d8] sm:$0xf]
    %v273 = vld [vmem:[#allocation5 + $0x1dc] sm:$0xf]
    %v274 = vld [vmem:[#allocation5 + $0x1e0] sm:$0xf]
    %v275 = vld [vmem:[#allocation5 + $0x1e4] sm:$0xf]
    %v276 = vld [vmem:[#allocation5 + $0x1e8] sm:$0xf]
    %v277 = vld [vmem:[#allocation5 + $0x1ec] sm:$0xf]
    %v278 = vld [vmem:[#allocation5 + $0x1f0] sm:$0xf]
    %v279 = vld [vmem:[#allocation5 + $0x1f4] sm:$0xf]
    %v280 = vld [vmem:[#allocation5 + $0x1f8] sm:$0xf]
    %v281 = vld [vmem:[#allocation5 + $0x1fc] sm:$0xf]
    %v282 = vld [vmem:[#allocation5 + $0x200] sm:$0xf]
    %v283 = vld [vmem:[#allocation5 + $0x204] sm:$0xf]
    %v284 = vld [vmem:[#allocation5 + $0x208] sm:$0xf]
    %v285 = vld [vmem:[#allocation5 + $0x20c] sm:$0xf]
    %v286 = vld [vmem:[#allocation5 + $0x210] sm:$0xf]
    %v287 = vld [vmem:[#allocation5 + $0x214] sm:$0xf]
    %v288 = vld [vmem:[#allocation5 + $0x218] sm:$0xf]
    %v289 = vld [vmem:[#allocation5 + $0x21c] sm:$0xf]
    %v290 = vld [vmem:[#allocation5 + $0x220] sm:$0xf]
    %v291 = vld [vmem:[#allocation5 + $0x224] sm:$0xf]
    %v292 = vld [vmem:[#allocation5 + $0x228] sm:$0xf]
    %v293 = vld [vmem:[#allocation5 + $0x22c] sm:$0xf]
    %v294 = vld [vmem:[#allocation5 + $0x230] sm:$0xf]
    %v295 = vld [vmem:[#allocation5 + $0x234] sm:$0xf]
    %v296 = vld [vmem:[#allocation5 + $0x238] sm:$0xf]
    %v297 = vld [vmem:[#allocation5 + $0x23c] sm:$0xf]
    %v298 = vld [vmem:[#allocation5 + $0x240] sm:$0xf]
    %v299 = vld [vmem:[#allocation5 + $0x244] sm:$0xf]
    %v300 = vld [vmem:[#allocation5 + $0x248] sm:$0xf]
    %v301 = vld [vmem:[#allocation5 + $0x24c] sm:$0xf]
    %v302 = vld [vmem:[#allocation5 + $0x250] sm:$0xf]
    %v303 = vld [vmem:[#allocation5 + $0x254] sm:$0xf]
    %v304 = vld [vmem:[#allocation5 + $0x258] sm:$0xf]
    %v305 = vld [vmem:[#allocation5 + $0x25c] sm:$0xf]
    %v306 = vld [vmem:[#allocation5 + $0x260] sm:$0xf]
    %v307 = vld [vmem:[#allocation5 + $0x264] sm:$0xf]
    %v308 = vld [vmem:[#allocation5 + $0x268] sm:$0xf]
    %v309 = vld [vmem:[#allocation5 + $0x26c] sm:$0xf]
    %v310 = vld [vmem:[#allocation5 + $0x270] sm:$0xf]
    %v311 = vld [vmem:[#allocation5 + $0x274] sm:$0xf]
    %v312 = vld [vmem:[#allocation5 + $0x278] sm:$0xf]
    %v313 = vld [vmem:[#allocation5 + $0x27c] sm:$0xf]
    %v314 = vld [vmem:[#allocation5 + $0x280] sm:$0xf]
    %v315 = vld [vmem:[#allocation5 + $0x284] sm:$0xf]
    %v316 = vld [vmem:[#allocation5 + $0x288] sm:$0xf]
    %v317 = vld [vmem:[#allocation5 + $0x28c] sm:$0xf]
    %v318 = vld [vmem:[#allocation5 + $0x290] sm:$0xf]
    %v319 = vld [vmem:[#allocation5 + $0x294] sm:$0xf]
    %v320 = vld [vmem:[#allocation5 + $0x298] sm:$0xf]
    %v321 = vld [vmem:[#allocation5 + $0x29c] sm:$0xf]
    %v322 = vld [vmem:[#allocation5 + $0x2a0] sm:$0xf]
    %v323 = vld [vmem:[#allocation5 + $0x2a4] sm:$0xf]
    %v324 = vld [vmem:[#allocation5 + $0x2a8] sm:$0xf]
    %v325 = vld [vmem:[#allocation5 + $0x2ac] sm:$0xf]
    %v326 = vld [vmem:[#allocation5 + $0x2b0] sm:$0xf]
    %v327 = vld [vmem:[#allocation5 + $0x2b4] sm:$0xf]
    %v328 = vld [vmem:[#allocation5 + $0x2b8] sm:$0xf]
    %v329 = vld [vmem:[#allocation5 + $0x2bc] sm:$0xf]
    %v330 = vld [vmem:[#allocation5 + $0x2c0] sm:$0xf]
    %v331 = vld [vmem:[#allocation5 + $0x2c4] sm:$0xf]
    %v332 = vld [vmem:[#allocation5 + $0x2c8] sm:$0xf]
    %v333 = vld [vmem:[#allocation5 + $0x2cc] sm:$0xf]
    %v334 = vld [vmem:[#allocation5 + $0x2d0] sm:$0xf]
    %v335 = vld [vmem:[#allocation5 + $0x2d4] sm:$0xf]
    %v336 = vld [vmem:[#allocation5 + $0x2d8] sm:$0xf]
    %v337 = vld [vmem:[#allocation5 + $0x2dc] sm:$0xf]
    %v338 = vld [vmem:[#allocation5 + $0x2e0] sm:$0xf]
    %v339 = vld [vmem:[#allocation5 + $0x2e4] sm:$0xf]
    %v340 = vld [vmem:[#allocation5 + $0x2e8] sm:$0xf]
    %v341 = vld [vmem:[#allocation5 + $0x2ec] sm:$0xf]
    %v342 = vld [vmem:[#allocation5 + $0x2f0] sm:$0xf]
    %v343 = vld [vmem:[#allocation5 + $0x2f4] sm:$0xf]
    %v344 = vld [vmem:[#allocation5 + $0x2f8] sm:$0xf]
    %v345 = vld [vmem:[#allocation5 + $0x2fc] sm:$0xf]
    %v346 = vld [vmem:[#allocation5 + $0x300] sm:$0xf]
    %v347 = vld [vmem:[#allocation5 + $0x304] sm:$0xf]
    %v348 = vld [vmem:[#allocation5 + $0x308] sm:$0xf]
    %v349 = vld [vmem:[#allocation5 + $0x30c] sm:$0xf]
    %v350 = vld [vmem:[#allocation5 + $0x310] sm:$0xf]
    %v351 = vld [vmem:[#allocation5 + $0x314] sm:$0xf]
    %v352 = vld [vmem:[#allocation5 + $0x318] sm:$0xf]
    %v353 = vld [vmem:[#allocation5 + $0x31c] sm:$0xf]
    %v354 = vld [vmem:[%s2] sm:$0x1]
    %v356 = vperm.slane %v354, 0
    %v558 = vunpack.c.l.b16 %v154
    %v559 = vunpack.c.l.b16 %v155
    %v560 = vunpack.c.l.b16 %v156
    %v561 = vunpack.c.l.b16 %v157
    %v562 = vunpack.c.l.b16 %v158
    %v563 = vunpack.c.l.b16 %v159
    %v564 = vunpack.c.l.b16 %v160
    %v565 = vunpack.c.l.b16 %v161
    %v566 = vunpack.c.l.b16 %v162
    %v567 = vunpack.c.l.b16 %v163
    %v568 = vunpack.c.l.b16 %v164
    %v569 = vunpack.c.l.b16 %v165
    %v570 = vunpack.c.l.b16 %v166
    %v571 = vunpack.c.l.b16 %v167
    %v572 = vunpack.c.l.b16 %v168
    %v573 = vunpack.c.l.b16 %v169
    %v574 = vunpack.c.l.b16 %v170
    %v575 = vunpack.c.l.b16 %v171
    %v576 = vunpack.c.l.b16 %v172
    %v577 = vunpack.c.l.b16 %v173
    %v578 = vunpack.c.l.b16 %v174
    %v579 = vunpack.c.l.b16 %v175
    %v580 = vunpack.c.l.b16 %v176
    %v581 = vunpack.c.l.b16 %v177
    %v582 = vunpack.c.l.b16 %v178
    %v583 = vunpack.c.l.b16 %v179
    %v584 = vunpack.c.l.b16 %v180
    %v585 = vunpack.c.l.b16 %v181
    %v586 = vunpack.c.l.b16 %v182
    %v587 = vunpack.c.l.b16 %v183
    %v588 = vunpack.c.l.b16 %v184
    %v589 = vunpack.c.l.b16 %v185
    %v590 = vunpack.c.l.b16 %v186
    %v591 = vunpack.c.l.b16 %v187
    %v592 = vunpack.c.l.b16 %v188
    %v593 = vunpack.c.l.b16 %v189
    %v594 = vunpack.c.l.b16 %v190
    %v595 = vunpack.c.l.b16 %v191
    %v596 = vunpack.c.l.b16 %v192
    %v597 = vunpack.c.l.b16 %v193
    %v598 = vunpack.c.l.b16 %v194
    %v599 = vunpack.c.l.b16 %v195
    %v600 = vunpack.c.l.b16 %v196
    %v601 = vunpack.c.l.b16 %v197
    %v602 = vunpack.c.l.b16 %v198
    %v603 = vunpack.c.l.b16 %v199
    %v604 = vunpack.c.l.b16 %v200
    %v605 = vunpack.c.l.b16 %v201
    %v606 = vunpack.c.l.b16 %v202
    %v607 = vunpack.c.l.b16 %v203
    %v608 = vunpack.c.l.b16 %v204
    %v609 = vunpack.c.l.b16 %v205
    %v610 = vunpack.c.l.b16 %v206
    %v611 = vunpack.c.l.b16 %v207
    %v612 = vunpack.c.l.b16 %v208
    %v613 = vunpack.c.l.b16 %v209
    %v614 = vunpack.c.l.b16 %v210
    %v615 = vunpack.c.l.b16 %v211
    %v616 = vunpack.c.l.b16 %v212
    %v617 = vunpack.c.l.b16 %v213
    %v618 = vunpack.c.l.b16 %v214
    %v619 = vunpack.c.l.b16 %v215
    %v620 = vunpack.c.l.b16 %v216
    %v621 = vunpack.c.l.b16 %v217
    %v622 = vunpack.c.l.b16 %v218
    %v623 = vunpack.c.l.b16 %v219
    %v624 = vunpack.c.l.b16 %v220
    %v625 = vunpack.c.l.b16 %v221
    %v626 = vunpack.c.l.b16 %v222
    %v627 = vunpack.c.l.b16 %v223
    %v628 = vunpack.c.l.b16 %v224
    %v629 = vunpack.c.l.b16 %v225
    %v630 = vunpack.c.l.b16 %v226
    %v631 = vunpack.c.l.b16 %v227
    %v632 = vunpack.c.l.b16 %v228
    %v633 = vunpack.c.l.b16 %v229
    %v634 = vunpack.c.l.b16 %v230
    %v635 = vunpack.c.l.b16 %v231
    %v636 = vunpack.c.l.b16 %v232
    %v637 = vunpack.c.l.b16 %v233
    %v638 = vunpack.c.l.b16 %v234
    %v639 = vunpack.c.l.b16 %v235
    %v640 = vunpack.c.l.b16 %v236
    %v641 = vunpack.c.l.b16 %v237
    %v642 = vunpack.c.l.b16 %v238
    %v643 = vunpack.c.l.b16 %v239
    %v644 = vunpack.c.l.b16 %v240
    %v645 = vunpack.c.l.b16 %v241
    %v646 = vunpack.c.l.b16 %v242
    %v647 = vunpack.c.l.b16 %v243
    %v648 = vunpack.c.l.b16 %v244
    %v649 = vunpack.c.l.b16 %v245
    %v650 = vunpack.c.l.b16 %v246
    %v651 = vunpack.c.l.b16 %v247
    %v652 = vunpack.c.l.b16 %v248
    %v653 = vunpack.c.l.b16 %v249
    %v654 = vunpack.c.l.b16 %v250
    %v655 = vunpack.c.l.b16 %v251
    %v656 = vunpack.c.l.b16 %v252
    %v657 = vunpack.c.l.b16 %v253
    %v658 = vunpack.c.l.b16 %v254
    %v659 = vunpack.c.l.b16 %v255
    %v660 = vunpack.c.l.b16 %v256
    %v661 = vunpack.c.l.b16 %v257
    %v662 = vunpack.c.l.b16 %v258
    %v663 = vunpack.c.l.b16 %v259
    %v664 = vunpack.c.l.b16 %v260
    %v665 = vunpack.c.l.b16 %v261
    %v666 = vunpack.c.l.b16 %v262
    %v667 = vunpack.c.l.b16 %v263
    %v668 = vunpack.c.l.b16 %v264
    %v669 = vunpack.c.l.b16 %v265
    %v670 = vunpack.c.l.b16 %v266
    %v671 = vunpack.c.l.b16 %v267
    %v672 = vunpack.c.l.b16 %v268
    %v673 = vunpack.c.l.b16 %v269
    %v674 = vunpack.c.l.b16 %v270
    %v675 = vunpack.c.l.b16 %v271
    %v676 = vunpack.c.l.b16 %v272
    %v677 = vunpack.c.l.b16 %v273
    %v678 = vunpack.c.l.b16 %v274
    %v679 = vunpack.c.l.b16 %v275
    %v680 = vunpack.c.l.b16 %v276
    %v681 = vunpack.c.l.b16 %v277
    %v682 = vunpack.c.l.b16 %v278
    %v683 = vunpack.c.l.b16 %v279
    %v684 = vunpack.c.l.b16 %v280
    %v685 = vunpack.c.l.b16 %v281
    %v686 = vunpack.c.l.b16 %v282
    %v687 = vunpack.c.l.b16 %v283
    %v688 = vunpack.c.l.b16 %v284
    %v689 = vunpack.c.l.b16 %v285
    %v690 = vunpack.c.l.b16 %v286
    %v691 = vunpack.c.l.b16 %v287
    %v692 = vunpack.c.l.b16 %v288
    %v693 = vunpack.c.l.b16 %v289
    %v694 = vunpack.c.l.b16 %v290
    %v695 = vunpack.c.l.b16 %v291
    %v696 = vunpack.c.l.b16 %v292
    %v697 = vunpack.c.l.b16 %v293
    %v698 = vunpack.c.l.b16 %v294
    %v699 = vunpack.c.l.b16 %v295
    %v700 = vunpack.c.l.b16 %v296
    %v701 = vunpack.c.l.b16 %v297
    %v702 = vunpack.c.l.b16 %v298
    %v703 = vunpack.c.l.b16 %v299
    %v704 = vunpack.c.l.b16 %v300
    %v705 = vunpack.c.l.b16 %v301
    %v706 = vunpack.c.l.b16 %v302
    %v707 = vunpack.c.l.b16 %v303
    %v708 = vunpack.c.l.b16 %v304
    %v709 = vunpack.c.l.b16 %v305
    %v710 = vunpack.c.l.b16 %v306
    %v711 = vunpack.c.l.b16 %v307
    %v712 = vunpack.c.l.b16 %v308
    %v713 = vunpack.c.l.b16 %v309
    %v714 = vunpack.c.l.b16 %v310
    %v715 = vunpack.c.l.b16 %v311
    %v716 = vunpack.c.l.b16 %v312
    %v717 = vunpack.c.l.b16 %v313
    %v718 = vunpack.c.l.b16 %v314
    %v719 = vunpack.c.l.b16 %v315
    %v720 = vunpack.c.l.b16 %v316
    %v721 = vunpack.c.l.b16 %v317
    %v722 = vunpack.c.l.b16 %v318
    %v723 = vunpack.c.l.b16 %v319
    %v724 = vunpack.c.l.b16 %v320
    %v725 = vunpack.c.l.b16 %v321
    %v726 = vunpack.c.l.b16 %v322
    %v727 = vunpack.c.l.b16 %v323
    %v728 = vunpack.c.l.b16 %v324
    %v729 = vunpack.c.l.b16 %v325
    %v730 = vunpack.c.l.b16 %v326
    %v731 = vunpack.c.l.b16 %v327
    %v732 = vunpack.c.l.b16 %v328
    %v733 = vunpack.c.l.b16 %v329
    %v734 = vunpack.c.l.b16 %v330
    %v735 = vunpack.c.l.b16 %v331
    %v736 = vunpack.c.l.b16 %v332
    %v737 = vunpack.c.l.b16 %v333
    %v738 = vunpack.c.l.b16 %v334
    %v739 = vunpack.c.l.b16 %v335
    %v740 = vunpack.c.l.b16 %v336
    %v741 = vunpack.c.l.b16 %v337
    %v742 = vunpack.c.l.b16 %v338
    %v743 = vunpack.c.l.b16 %v339
    %v744 = vunpack.c.l.b16 %v340
    %v745 = vunpack.c.l.b16 %v341
    %v746 = vunpack.c.l.b16 %v342
    %v747 = vunpack.c.l.b16 %v343
    %v748 = vunpack.c.l.b16 %v344
    %v749 = vunpack.c.l.b16 %v345
    %v750 = vunpack.c.l.b16 %v346
    %v751 = vunpack.c.l.b16 %v347
    %v752 = vunpack.c.l.b16 %v348
    %v753 = vunpack.c.l.b16 %v349
    %v754 = vunpack.c.l.b16 %v350
    %v755 = vunpack.c.l.b16 %v351
    %v756 = vunpack.c.l.b16 %v352
    %v757 = vunpack.c.l.b16 %v353
    %v758 = vpack.c.b16 %v559, %v558
    %v759 = vpack.c.b16 %v561, %v560
    %v760 = vpack.c.b16 %v563, %v562
    %v761 = vpack.c.b16 %v565, %v564
    %v762 = vpack.c.b16 %v567, %v566
    %v763 = vpack.c.b16 %v569, %v568
    %v764 = vpack.c.b16 %v571, %v570
    %v765 = vpack.c.b16 %v573, %v572
    %v766 = vpack.c.b16 %v575, %v574
    %v767 = vpack.c.b16 %v577, %v576
    %v768 = vpack.c.b16 %v579, %v578
    %v769 = vpack.c.b16 %v581, %v580
    %v770 = vpack.c.b16 %v583, %v582
    %v771 = vpack.c.b16 %v585, %v584
    %v772 = vpack.c.b16 %v587, %v586
    %v773 = vpack.c.b16 %v589, %v588
    %v774 = vpack.c.b16 %v591, %v590
    %v775 = vpack.c.b16 %v593, %v592
    %v776 = vpack.c.b16 %v595, %v594
    %v777 = vpack.c.b16 %v597, %v596
    %v778 = vpack.c.b16 %v599, %v598
    %v779 = vpack.c.b16 %v601, %v600
    %v780 = vpack.c.b16 %v603, %v602
    %v781 = vpack.c.b16 %v605, %v604
    %v782 = vpack.c.b16 %v607, %v606
    %v783 = vpack.c.b16 %v609, %v608
    %v784 = vpack.c.b16 %v611, %v610
    %v785 = vpack.c.b16 %v613, %v612
    %v786 = vpack.c.b16 %v615, %v614
    %v787 = vpack.c.b16 %v617, %v616
    %v788 = vpack.c.b16 %v619, %v618
    %v789 = vpack.c.b16 %v621, %v620
    %v790 = vpack.c.b16 %v623, %v622
    %v791 = vpack.c.b16 %v625, %v624
    %v792 = vpack.c.b16 %v627, %v626
    %v793 = vpack.c.b16 %v629, %v628
    %v794 = vpack.c.b16 %v631, %v630
    %v795 = vpack.c.b16 %v633, %v632
    %v796 = vpack.c.b16 %v635, %v634
    %v797 = vpack.c.b16 %v637, %v636
    %v798 = vpack.c.b16 %v639, %v638
    %v799 = vpack.c.b16 %v641, %v640
    %v800 = vpack.c.b16 %v643, %v642
    %v801 = vpack.c.b16 %v645, %v644
    %v802 = vpack.c.b16 %v647, %v646
    %v803 = vpack.c.b16 %v649, %v648
    %v804 = vpack.c.b16 %v651, %v650
    %v805 = vpack.c.b16 %v653, %v652
    %v806 = vpack.c.b16 %v655, %v654
    %v807 = vpack.c.b16 %v657, %v656
    %v808 = vpack.c.b16 %v659, %v658
    %v809 = vpack.c.b16 %v661, %v660
    %v810 = vpack.c.b16 %v663, %v662
    %v811 = vpack.c.b16 %v665, %v664
    %v812 = vpack.c.b16 %v667, %v666
    %v813 = vpack.c.b16 %v669, %v668
    %v814 = vpack.c.b16 %v671, %v670
    %v815 = vpack.c.b16 %v673, %v672
    %v816 = vpack.c.b16 %v675, %v674
    %v817 = vpack.c.b16 %v677, %v676
    %v818 = vpack.c.b16 %v679, %v678
    %v819 = vpack.c.b16 %v681, %v680
    %v820 = vpack.c.b16 %v683, %v682
    %v821 = vpack.c.b16 %v685, %v684
    %v822 = vpack.c.b16 %v687, %v686
    %v823 = vpack.c.b16 %v689, %v688
    %v824 = vpack.c.b16 %v691, %v690
    %v825 = vpack.c.b16 %v693, %v692
    %v826 = vpack.c.b16 %v695, %v694
    %v827 = vpack.c.b16 %v697, %v696
    %v828 = vpack.c.b16 %v699, %v698
    %v829 = vpack.c.b16 %v701, %v700
    %v830 = vpack.c.b16 %v703, %v702
    %v831 = vpack.c.b16 %v705, %v704
    %v832 = vpack.c.b16 %v707, %v706
    %v833 = vpack.c.b16 %v709, %v708
    %v834 = vpack.c.b16 %v711, %v710
    %v835 = vpack.c.b16 %v713, %v712
    %v836 = vpack.c.b16 %v715, %v714
    %v837 = vpack.c.b16 %v717, %v716
    %v838 = vpack.c.b16 %v719, %v718
    %v839 = vpack.c.b16 %v721, %v720
    %v840 = vpack.c.b16 %v723, %v722
    %v841 = vpack.c.b16 %v725, %v724
    %v842 = vpack.c.b16 %v727, %v726
    %v843 = vpack.c.b16 %v729, %v728
    %v844 = vpack.c.b16 %v731, %v730
    %v845 = vpack.c.b16 %v733, %v732
    %v846 = vpack.c.b16 %v735, %v734
    %v847 = vpack.c.b16 %v737, %v736
    %v848 = vpack.c.b16 %v739, %v738
    %v849 = vpack.c.b16 %v741, %v740
    %v850 = vpack.c.b16 %v743, %v742
    %v851 = vpack.c.b16 %v745, %v744
    %v852 = vpack.c.b16 %v747, %v746
    %v853 = vpack.c.b16 %v749, %v748
    %v854 = vpack.c.b16 %v751, %v750
    %v855 = vpack.c.b16 %v753, %v752
    %v856 = vpack.c.b16 %v755, %v754
    %v857 = vpack.c.b16 %v757, %v756
    %vm958 = vcmask 523264
    %v960 = vsel %vm958, %v153, 0
    %962 = vmatpush.bf16.msra.mxu0 %v765
    %963 = vmatpush.bf16.msra.mxu0 %v764
    %964 = vmatpush.bf16.msra.mxu0 %v763
    %965 = vmatpush.bf16.msra.mxu0 %v762
    %966 = vmatpush.bf16.msra.mxu0 %v761
    %967 = vmatpush.bf16.msra.mxu0 %v760
    %968 = vmatpush.bf16.msra.mxu0 %v759
    %969 = vmatpush.bf16.msra.mxu0 %v758
    %970 = vmatmul.bf16.gmra.mxu0 %v141
    %v971 = vpop.f32.mrf.mxu0
    %v972 = vadd.f32 %v356, %v971
    %v973 = vpop.f32.mrf.mxu0
    %974 = vdwg.mxu0
    %975 = vmatpush.bf16.msra.mxu0 %v773
    %976 = vmatpush.bf16.msra.mxu0 %v772
    %977 = vmatpush.bf16.msra.mxu0 %v771
    %978 = vmatpush.bf16.msra.mxu0 %v770
    %979 = vmatpush.bf16.msra.mxu0 %v769
    %980 = vmatpush.bf16.msra.mxu0 %v768
    %981 = vmatpush.bf16.msra.mxu0 %v767
    %982 = vmatpush.bf16.msra.mxu0 %v766
    %983 = vmatmul.bf16.gmra.mxu0 %v142
    %v984 = vpop.f32.mrf.mxu0
    %v985 = vadd.f32 %v972, %v984
    %v986 = vpop.f32.mrf.mxu0
    %987 = vdwg.mxu0
    %988 = vmatpush.bf16.msra.mxu0 %v781
    %989 = vmatpush.bf16.msra.mxu0 %v780
    %990 = vmatpush.bf16.msra.mxu0 %v779
    %991 = vmatpush.bf16.msra.mxu0 %v778
    %992 = vmatpush.bf16.msra.mxu0 %v777
    %993 = vmatpush.bf16.msra.mxu0 %v776
    %994 = vmatpush.bf16.msra.mxu0 %v775
    %995 = vmatpush.bf16.msra.mxu0 %v774
    %996 = vmatmul.bf16.gmra.mxu0 %v143
    %v997 = vpop.f32.mrf.mxu0
    %v998 = vadd.f32 %v985, %v997
    %v999 = vpop.f32.mrf.mxu0
    %1000 = vdwg.mxu0
    %1001 = vmatpush.bf16.msra.mxu0 %v789
    %1002 = vmatpush.bf16.msra.mxu0 %v788
    %1003 = vmatpush.bf16.msra.mxu0 %v787
    %1004 = vmatpush.bf16.msra.mxu0 %v786
    %1005 = vmatpush.bf16.msra.mxu0 %v785
    %1006 = vmatpush.bf16.msra.mxu0 %v784
    %1007 = vmatpush.bf16.msra.mxu0 %v783
    %1008 = vmatpush.bf16.msra.mxu0 %v782
    %1009 = vmatmul.bf16.gmra.mxu0 %v144
    %v1010 = vpop.f32.mrf.mxu0
    %v1011 = vadd.f32 %v998, %v1010
    %v1012 = vpop.f32.mrf.mxu0
    %1013 = vdwg.mxu0
    %1014 = vmatpush.bf16.msra.mxu0 %v797
    %1015 = vmatpush.bf16.msra.mxu0 %v796
    %1016 = vmatpush.bf16.msra.mxu0 %v795
    %1017 = vmatpush.bf16.msra.mxu0 %v794
    %1018 = vmatpush.bf16.msra.mxu0 %v793
    %1019 = vmatpush.bf16.msra.mxu0 %v792
    %1020 = vmatpush.bf16.msra.mxu0 %v791
    %1021 = vmatpush.bf16.msra.mxu0 %v790
    %1022 = vmatmul.bf16.gmra.mxu0 %v145
    %v1023 = vpop.f32.mrf.mxu0
    %v1024 = vadd.f32 %v1011, %v1023
    %v1025 = vpop.f32.mrf.mxu0
    %1026 = vdwg.mxu0
    %1027 = vmatpush.bf16.msra.mxu0 %v805
    %1028 = vmatpush.bf16.msra.mxu0 %v804
    %1029 = vmatpush.bf16.msra.mxu0 %v803
    %1030 = vmatpush.bf16.msra.mxu0 %v802
    %1031 = vmatpush.bf16.msra.mxu0 %v801
    %1032 = vmatpush.bf16.msra.mxu0 %v800
    %1033 = vmatpush.bf16.msra.mxu0 %v799
    %1034 = vmatpush.bf16.msra.mxu0 %v798
    %1035 = vmatmul.bf16.gmra.mxu0 %v146
    %v1036 = vpop.f32.mrf.mxu0
    %v1037 = vadd.f32 %v1024, %v1036
    %v1038 = vpop.f32.mrf.mxu0
    %1039 = vdwg.mxu0
    %1040 = vmatpush.bf16.msra.mxu0 %v813
    %1041 = vmatpush.bf16.msra.mxu0 %v812
    %1042 = vmatpush.bf16.msra.mxu0 %v811
    %1043 = vmatpush.bf16.msra.mxu0 %v810
    %1044 = vmatpush.bf16.msra.mxu0 %v809
    %1045 = vmatpush.bf16.msra.mxu0 %v808
    %1046 = vmatpush.bf16.msra.mxu0 %v807
    %1047 = vmatpush.bf16.msra.mxu0 %v806
    %1048 = vmatmul.bf16.gmra.mxu0 %v147
    %v1049 = vpop.f32.mrf.mxu0
    %v1050 = vadd.f32 %v1037, %v1049
    %v1051 = vpop.f32.mrf.mxu0
    %1052 = vdwg.mxu0
    %1053 = vmatpush.bf16.msra.mxu0 %v821
    %1054 = vmatpush.bf16.msra.mxu0 %v820
    %1055 = vmatpush.bf16.msra.mxu0 %v819
    %1056 = vmatpush.bf16.msra.mxu0 %v818
    %1057 = vmatpush.bf16.msra.mxu0 %v817
    %1058 = vmatpush.bf16.msra.mxu0 %v816
    %1059 = vmatpush.bf16.msra.mxu0 %v815
    %1060 = vmatpush.bf16.msra.mxu0 %v814
    %1061 = vmatmul.bf16.gmra.mxu0 %v148
    %v1062 = vpop.f32.mrf.mxu0
    %v1063 = vadd.f32 %v1050, %v1062
    %v1064 = vpop.f32.mrf.mxu0
    %1065 = vdwg.mxu0
    %1066 = vmatpush.bf16.msra.mxu0 %v829
    %1067 = vmatpush.bf16.msra.mxu0 %v828
    %1068 = vmatpush.bf16.msra.mxu0 %v827
    %1069 = vmatpush.bf16.msra.mxu0 %v826
    %1070 = vmatpush.bf16.msra.mxu0 %v825
    %1071 = vmatpush.bf16.msra.mxu0 %v824
    %1072 = vmatpush.bf16.msra.mxu0 %v823
    %1073 = vmatpush.bf16.msra.mxu0 %v822
    %1074 = vmatmul.bf16.gmra.mxu0 %v149
    %v1075 = vpop.f32.mrf.mxu0
    %v1076 = vadd.f32 %v1063, %v1075
    %v1077 = vpop.f32.mrf.mxu0
    %1078 = vdwg.mxu0
    %1079 = vmatpush.bf16.msra.mxu0 %v837
    %1080 = vmatpush.bf16.msra.mxu0 %v836
    %1081 = vmatpush.bf16.msra.mxu0 %v835
    %1082 = vmatpush.bf16.msra.mxu0 %v834
    %1083 = vmatpush.bf16.msra.mxu0 %v833
    %1084 = vmatpush.bf16.msra.mxu0 %v832
    %1085 = vmatpush.bf16.msra.mxu0 %v831
    %1086 = vmatpush.bf16.msra.mxu0 %v830
    %1087 = vmatmul.bf16.gmra.mxu0 %v150
    %v1088 = vpop.f32.mrf.mxu0
    %v1089 = vadd.f32 %v1076, %v1088
    %v1090 = vpop.f32.mrf.mxu0
    %1091 = vdwg.mxu0
    %1092 = vmatpush.bf16.msra.mxu0 %v845
    %1093 = vmatpush.bf16.msra.mxu0 %v844
    %1094 = vmatpush.bf16.msra.mxu0 %v843
    %1095 = vmatpush.bf16.msra.mxu0 %v842
    %1096 = vmatpush.bf16.msra.mxu0 %v841
    %1097 = vmatpush.bf16.msra.mxu0 %v840
    %1098 = vmatpush.bf16.msra.mxu0 %v839
    %1099 = vmatpush.bf16.msra.mxu0 %v838
    %1100 = vmatmul.bf16.gmra.mxu0 %v151
    %v1101 = vpop.f32.mrf.mxu0
    %v1102 = vadd.f32 %v1089, %v1101
    %v1103 = vpop.f32.mrf.mxu0
    %1104 = vdwg.mxu0
    %1105 = vmatpush.bf16.msra.mxu0 %v853
    %1106 = vmatpush.bf16.msra.mxu0 %v852
    %1107 = vmatpush.bf16.msra.mxu0 %v851
    %1108 = vmatpush.bf16.msra.mxu0 %v850
    %1109 = vmatpush.bf16.msra.mxu0 %v849
    %1110 = vmatpush.bf16.msra.mxu0 %v848
    %1111 = vmatpush.bf16.msra.mxu0 %v847
    %1112 = vmatpush.bf16.msra.mxu0 %v846
    %1113 = vmatmul.bf16.gmra.mxu0 %v152
    %v1114 = vpop.f32.mrf.mxu0
    %v1115 = vadd.f32 %v1102, %v1114
    %v1116 = vpop.f32.mrf.mxu0
    %1117 = vdwg.mxu0
    %1118 = vmatpush.bf16.msra.mxu0 0
    %1119 = vmatpush.bf16.msra.mxu0 0
    %1120 = vmatpush.bf16.msra.mxu0 0
    %1121 = vmatpush.bf16.msra.mxu0 0
    %1122 = vmatpush.bf16.msra.mxu0 %v857
    %1123 = vmatpush.bf16.msra.mxu0 %v856
    %1124 = vmatpush.bf16.msra.mxu0 %v855
    %1125 = vmatpush.bf16.msra.mxu0 %v854
    %1126 = vmatmul.bf16.gmra.mxu0 %v960
    %v1127 = vpop.f32.mrf.mxu0
    %v1128 = vadd.f32 %v1115, %v1127
    %v1129 = vpop.f32.mrf.mxu0
    %1130 = vdwg.mxu0
    %v1131 = vmax.f32 %v1128, 0.0
    %v1132 = vpack.c.bf16 %v1131, %v1131
    %v1133 = vld [vmem:[%s3] sm:$0xf]
    %v1134 = vld [vmem:[%s3 + $0x4] sm:$0xf]
    %v1135 = vld [vmem:[%s3 + $0x8] sm:$0xf]
    %v1136 = vld [vmem:[%s3 + $0xc] sm:$0xf]
    %v1137 = vld [vmem:[%s3 + $0x10] sm:$0xf]
    %v1138 = vld [vmem:[%s3 + $0x14] sm:$0xf]
    %v1139 = vld [vmem:[%s3 + $0x18] sm:$0xf]
    %v1140 = vld [vmem:[%s3 + $0x1c] sm:$0xf]
    %v1141 = vld [vmem:[%s3 + $0x20] sm:$0xf]
    %v1142 = vld [vmem:[%s3 + $0x24] sm:$0xf]
    %v1143 = vld [vmem:[%s3 + $0x28] sm:$0xf]
    %v1144 = vld [vmem:[%s3 + $0x2c] sm:$0xf]
    %v1145 = vld [vmem:[%s3 + $0x30] sm:$0xf]
    %v1146 = vld [vmem:[%s3 + $0x34] sm:$0xf]
    %v1147 = vld [vmem:[%s3 + $0x38] sm:$0xf]
    %v1148 = vld [vmem:[%s3 + $0x3c] sm:$0xf]
    %v1149 = vld [vmem:[%s4] sm:$0x1]
    %v1151 = vperm.slane %v1149, 0
    %v1169 = vunpack.c.l.b16 %v1133
    %v1170 = vunpack.c.l.b16 %v1134
    %v1171 = vunpack.c.l.b16 %v1135
    %v1172 = vunpack.c.l.b16 %v1136
    %v1173 = vunpack.c.l.b16 %v1137
    %v1174 = vunpack.c.l.b16 %v1138
    %v1175 = vunpack.c.l.b16 %v1139
    %v1176 = vunpack.c.l.b16 %v1140
    %v1177 = vunpack.c.l.b16 %v1141
    %v1178 = vunpack.c.l.b16 %v1142
    %v1179 = vunpack.c.l.b16 %v1143
    %v1180 = vunpack.c.l.b16 %v1144
    %v1181 = vunpack.c.l.b16 %v1145
    %v1182 = vunpack.c.l.b16 %v1146
    %v1183 = vunpack.c.l.b16 %v1147
    %v1184 = vunpack.c.l.b16 %v1148
    %v1185 = vpack.c.b16 %v1170, %v1169
    %v1186 = vpack.c.b16 %v1172, %v1171
    %v1187 = vpack.c.b16 %v1174, %v1173
    %v1188 = vpack.c.b16 %v1176, %v1175
    %v1189 = vpack.c.b16 %v1178, %v1177
    %v1190 = vpack.c.b16 %v1180, %v1179
    %v1191 = vpack.c.b16 %v1182, %v1181
    %v1192 = vpack.c.b16 %v1184, %v1183
    %1201 = vmatpush.bf16.msra.mxu0 %v1192
    %1202 = vmatpush.bf16.msra.mxu0 %v1191
    %1203 = vmatpush.bf16.msra.mxu0 %v1190
    %1204 = vmatpush.bf16.msra.mxu0 %v1189
    %1205 = vmatpush.bf16.msra.mxu0 %v1188
    %1206 = vmatpush.bf16.msra.mxu0 %v1187
    %1207 = vmatpush.bf16.msra.mxu0 %v1186
    %1208 = vmatpush.bf16.msra.mxu0 %v1185
    %1209 = vmatmul.bf16.gmra.mxu0 %v1132
    %v1210 = vpop.f32.mrf.mxu0
    %v1211 = vadd.f32 %v1151, %v1210
    %v1212 = vpop.f32.mrf.mxu0
    %1213 = vdwg.mxu0
    %v1214 = vmax.f32 %v1211, 0.0
    %v1215 = vpack.c.bf16 %v1214, %v1214
    %v1216 = vld [vmem:[%s5] sm:$0xf]
    %v1217 = vld [vmem:[%s5 + $0x4] sm:$0xf]
    %v1218 = vld [vmem:[%s5 + $0x8] sm:$0xf]
    %v1219 = vld [vmem:[%s5 + $0xc] sm:$0xf]
    %v1220 = vld [vmem:[%s5 + $0x10] sm:$0xf]
    %v1221 = vld [vmem:[%s5 + $0x14] sm:$0xf]
    %v1222 = vld [vmem:[%s5 + $0x18] sm:$0xf]
    %v1223 = vld [vmem:[%s5 + $0x1c] sm:$0xf]
    %v1224 = vld [vmem:[%s5 + $0x20] sm:$0xf]
    %v1225 = vld [vmem:[%s5 + $0x24] sm:$0xf]
    %v1226 = vld [vmem:[%s5 + $0x28] sm:$0xf]
    %v1227 = vld [vmem:[%s5 + $0x2c] sm:$0xf]
    %v1228 = vld [vmem:[%s5 + $0x30] sm:$0xf]
    %v1229 = vld [vmem:[%s5 + $0x34] sm:$0xf]
    %v1230 = vld [vmem:[%s5 + $0x38] sm:$0xf]
    %v1231 = vld [vmem:[%s5 + $0x3c] sm:$0xf]
    %v1232 = vld [vmem:[%s6] sm:$0x1]
    %v1234 = vperm.slane %v1232, 0
    %v1252 = vunpack.c.l.b16 %v1216
    %v1253 = vunpack.c.l.b16 %v1217
    %v1254 = vunpack.c.l.b16 %v1218
    %v1255 = vunpack.c.l.b16 %v1219
    %v1256 = vunpack.c.l.b16 %v1220
    %v1257 = vunpack.c.l.b16 %v1221
    %v1258 = vunpack.c.l.b16 %v1222
    %v1259 = vunpack.c.l.b16 %v1223
    %v1260 = vunpack.c.l.b16 %v1224
    %v1261 = vunpack.c.l.b16 %v1225
    %v1262 = vunpack.c.l.b16 %v1226
    %v1263 = vunpack.c.l.b16 %v1227
    %v1264 = vunpack.c.l.b16 %v1228
    %v1265 = vunpack.c.l.b16 %v1229
    %v1266 = vunpack.c.l.b16 %v1230
    %v1267 = vunpack.c.l.b16 %v1231
    %v1268 = vpack.c.b16 %v1253, %v1252
    %v1269 = vpack.c.b16 %v1255, %v1254
    %v1270 = vpack.c.b16 %v1257, %v1256
    %v1271 = vpack.c.b16 %v1259, %v1258
    %v1272 = vpack.c.b16 %v1261, %v1260
    %v1273 = vpack.c.b16 %v1263, %v1262
    %v1274 = vpack.c.b16 %v1265, %v1264
    %v1275 = vpack.c.b16 %v1267, %v1266
    %1284 = vmatpush.bf16.msra.mxu0 %v1275
    %1285 = vmatpush.bf16.msra.mxu0 %v1274
    %1286 = vmatpush.bf16.msra.mxu0 %v1273
    %1287 = vmatpush.bf16.msra.mxu0 %v1272
    %1288 = vmatpush.bf16.msra.mxu0 %v1271
    %1289 = vmatpush.bf16.msra.mxu0 %v1270
    %1290 = vmatpush.bf16.msra.mxu0 %v1269
    %1291 = vmatpush.bf16.msra.mxu0 %v1268
    %1292 = vmatmul.bf16.gmra.mxu0 %v1215
    %v1293 = vpop.f32.mrf.mxu0
    %v1294 = vadd.f32 %v1234, %v1293
    %v1295 = vpop.f32.mrf.mxu0
    %1296 = vdwg.mxu0
    %vm1297 = vcmask 15360
    %1298 = vst.msk [vmem:[#allocation7] sm:$0xff] %vm1297, %v1294
    // Predicated region
    $region38: #{tpu_custom_call.1} parent=1 // pred_check
      _
    $region39: #{tpu_custom_call.1} parent=1 // pred_check_branch
      %1300 = sbr.rel (0) target = $region41
    $region40: #{tpu_custom_call.1} parent=1 // pred_region
      %1302 = vsyncadd [#allocation4], 96
      %s1303 = sshll.u32 [#allocation7], 4
      %s1304 = int_to_ptr.vmem [resolvable:$true] %s1303
      %s1305 = sshll.u32 %s7, 4
      %s1306 = int_to_ptr.hbm [resolvable:$true] %s1305
      %1311 = dma.vmem_to_hbm [thread:$0]  %s1304, 32, %s1306, [#allocation4], 32, 32, 2
    $region41: #{tpu_custom_call.1} parent=1 // pred_fallthru
      _
    // Predicated region
    $region42: #{tpu_custom_call.1} parent=1 // pred_check
      _
    $region43: #{tpu_custom_call.1} parent=1 // pred_check_branch
      %1313 = sbr.rel (0) target = $region45
    $region44: #{tpu_custom_call.1} parent=1 // pred_region
      %1315 = dma.done [#allocation4], 128
    $region45: #{tpu_custom_call.1} parent=1 // pred_fallthru
      _
    %1316 = vsyncpa [#allocation3], 1
    %1317 = vsyncpa [#allocation6], 1
    %1318 = vsyncpa [#allocation4], 1

</llo_original>
